<compile_context>
chip_gen: v5e
topology: v5e:2x2
jax: 0.10.0
libtpu: 0.0.40
codegen_flags: <defaults>
</compile_context>

<pallas_src>
import functools

import jax
import jax.numpy as jnp
from jax.experimental import pallas as pl
from jax.experimental.pallas import tpu as pltpu


def _cnn_encoder_kernel(x_ref, w_ref, b_ref, o_ref, cols_ref, h_ref, *,
                        kernel_size, padding, tb, seq_len, l_out):
    # x_ref   : (TB, L, E)    batch tile of embeddings (channels-last)
    # w_ref   : (K*E, F)      conv weights, tap-major rows
    # b_ref   : (1, F)        conv bias (f32)
    # o_ref   : (TB, F)       max-pooled + ReLU output
    # cols_ref: (L_out, K*E)  im2col scratch (compute dtype), reused per row
    # h_ref   : (TB, F)       f32 per-row max scratch
    k_sz, pad, seq = kernel_size, padding, seq_len
    e_dim = x_ref.shape[2]

    # Rows of the im2col that correspond to out-of-range (zero-padded) taps are
    # never overwritten below, so one zero-fill per grid step keeps them zero.
    cols_ref[...] = jnp.zeros_like(cols_ref)
    w = w_ref[...]

    for i in range(tb):                       # static unroll; tb kept small (<=8 by default)
        xi = x_ref[i]                         # (L, E)
        for k in range(k_sz):                 # static, tiny trip count
            s = k - pad                       # time shift of this tap
            t0 = max(0, -s)
            t1 = min(l_out, seq - s)
            if t1 > t0:
                cols_ref[t0:t1, k * e_dim:(k + 1) * e_dim] = xi[t0 + s:t1 + s, :]
        # one collapsed matmul per batch row: (L_out, K*E) @ (K*E, F)
        acc = jnp.dot(cols_ref[...], w, preferred_element_type=jnp.float32)
        h_ref[i:i + 1, :] = jnp.max(acc, axis=0, keepdims=True)

    # Epilogue on the whole (TB, F) block: bias after the max (bias is constant
    # over time, so this is exact), then ReLU.
    h = h_ref[...] + b_ref[...]
    o_ref[...] = jnp.maximum(h, 0.0).astype(o_ref.dtype)


def cnn_encoder(embeds, seq_lens, weight, bias, *, kernel_size, padding=1,
                batch_tile=8, compute_dtype=None):
    """embeds: (B, L, E); weight: (F, E, K) (PyTorch Conv1d layout); bias: (F,).

    seq_lens is accepted but unused, exactly like the PyTorch forward.
    compute_dtype: optionally cast embeds/weights (e.g. jnp.bfloat16 on
    v6e/v7x); accumulation and the epilogue stay in f32. Returns (B, F).
    """
    del seq_lens  # the reference forward ignores it (no masked pooling)
    B, L, E = embeds.shape
    F_out, E_w, K = weight.shape
    assert E_w == E and K == kernel_size
    L_out = L + 2 * padding - K + 1
    assert L_out >= 1
    out_dtype = embeds.dtype

    # (F, E, K) -> (K, E, F) -> (K*E, F): row k*E + e multiplies x[t + k - padding, e]
    w2 = jnp.transpose(weight, (2, 1, 0)).reshape(K * E, F_out)
    b2 = bias.reshape(1, F_out).astype(jnp.float32)

    if compute_dtype is not None:
        embeds = embeds.astype(compute_dtype)
        w2 = w2.astype(compute_dtype)

    tb = max(1, min(batch_tile, B))           # (TB, F) output blocks; TB multiple of 8 when B >= 8
    num_tiles = pl.cdiv(B, tb)                # rows of a partial last tile are masked on write

    kernel = functools.partial(
        _cnn_encoder_kernel, kernel_size=K, padding=padding, tb=tb,
        seq_len=L, l_out=L_out)

    in_bytes = embeds.size * embeds.dtype.itemsize
    w_bytes = w2.size * w2.dtype.itemsize + b2.size * 4
    out_bytes = B * F_out * out_dtype.itemsize
    cost = pl.CostEstimate(
        flops=2 * B * L_out * (K * E) * F_out,
        transcendentals=0,
        bytes_accessed=in_bytes + w_bytes + out_bytes)

    out = pl.pallas_call(
        kernel,
        out_shape=jax.ShapeDtypeStruct((B, F_out), out_dtype),
        grid_spec=pltpu.PrefetchScalarGridSpec(
            num_scalar_prefetch=0,
            grid=(num_tiles,),
            in_specs=[
                pl.BlockSpec((tb, L, E), lambda b: (b, 0, 0)),
                # weights / bias: constant index_map -> fetched once, VMEM-resident
                pl.BlockSpec((K * E, F_out), lambda b: (0, 0)),
                pl.BlockSpec((1, F_out), lambda b: (0, 0)),
            ],
            out_specs=pl.BlockSpec((tb, F_out), lambda b: (b, 0)),
            scratch_shapes=[
                pltpu.VMEM((L_out, K * E), embeds.dtype),   # im2col scratch
                pltpu.VMEM((tb, F_out), jnp.float32),       # per-row max scratch
            ],
        ),
        compiler_params=pltpu.CompilerParams(
            dimension_semantics=("parallel",)),  # v7x: batch tiles shard across 2 TCs
        cost_estimate=cost,
    )(embeds, w2, b2)
    return out


def _reference(embeds, weight, bias, *, kernel_size, padding=1):
    # pure-JAX reference with identical semantics (Conv1d -> max over time -> relu)
    x = jnp.transpose(embeds, (0, 2, 1))  # (B, E, L), NCW like the PyTorch permute
    h = jax.lax.conv_general_dilated(
        x, weight, window_strides=(1,), padding=[(padding, padding)],
        dimension_numbers=("NCH", "OIH", "NCH"))
    h = h + bias[None, :, None]
    h = jnp.max(h, axis=2)
    return jnp.maximum(h, 0.0)


if __name__ == "__main__":
    # small shapes consistent with the module; B chosen as a multiple of the
    # default batch tile (8) so the demo exercises a 2-step "parallel" grid.
    B, L, emb_dim, filters, kernel_size = 16, 12, 32, 16, 3

    key = jax.random.PRNGKey(0)
    k1, k2, k3, k4 = jax.random.split(key, 4)
    embeds = jax.random.normal(k1, (B, L, emb_dim), dtype=jnp.float32)
    seq_lens = jax.random.randint(k2, (B,), 1, L + 1)        # unused in forward
    weight = 0.1 * jax.random.normal(k3, (filters, emb_dim, kernel_size),
                                     dtype=jnp.float32)      # Conv1d weight layout
    bias = 0.1 * jax.random.normal(k4, (filters,), dtype=jnp.float32)

    ref = _reference(embeds, weight, bias, kernel_size=kernel_size)

    # default f32 path: must match the reference tightly
    out = cnn_encoder(embeds, seq_lens, weight, bias, kernel_size=kernel_size)
    out = jax.block_until_ready(out)
    assert out.shape == (B, filters)
    assert jnp.allclose(out, ref, atol=1e-5, rtol=1e-5)

    # bf16 operand path (recommended on v6e/v7x); accumulation stays f32, so
    # the loose tolerance only reflects operand rounding to bf16.
    out_bf16 = cnn_encoder(embeds, seq_lens, weight, bias,
                           kernel_size=kernel_size, compute_dtype=jnp.bfloat16)
    out_bf16 = jax.block_until_ready(out_bf16)
    assert jnp.allclose(out_bf16, ref, atol=5e-2, rtol=5e-2)

    print("KERNEL_OK")
</pallas_src>

<mosaic_0001>
module attributes {stable_mosaic.version = 11 : i64} {
  func.func @_cnn_encoder_kernel(%arg0: i32, %arg1: memref<8x12x32xf32, #tpu.memory_space<vmem>>, %arg2: memref<96x16xf32, #tpu.memory_space<vmem>>, %arg3: memref<1x16xf32, #tpu.memory_space<vmem>>, %arg4: memref<8x16xf32, #tpu.memory_space<vmem>>, %arg5: memref<12x96xf32, #tpu.memory_space<vmem>>, %arg6: memref<8x16xf32, #tpu.memory_space<vmem>>) attributes {dimension_semantics = [#tpu.dimension_semantics<parallel>], iteration_bounds = array<i64: 2>, scalar_prefetch = 0 : i64, scratch_operands = 2 : i64, tpu.core_type = #tpu.core_type<tc>, window_params = [{transform_indices = @transform_0, window_bounds = array<i64: 8, 12, 32>}, {pipeline_mode = #tpu.pipeline_mode<synchronous>, transform_indices = @transform_1, window_bounds = array<i64: 96, 16>}, {pipeline_mode = #tpu.pipeline_mode<synchronous>, transform_indices = @transform_2, window_bounds = array<i64: 1, 16>}, {transform_indices = @transform_3, window_bounds = array<i64: 8, 16>}]} {
    %cst = arith.constant 0.000000e+00 : f32
    %0 = vector.broadcast %cst : f32 to vector<12x96xf32>
    %c0 = arith.constant 0 : index
    %c0_0 = arith.constant 0 : index
    %1 = vector.load %arg5[%c0, %c0_0] : memref<12x96xf32, #tpu.memory_space<vmem>>, vector<12x96xf32>
    tpu.vector_store %arg5[%c0, %c0_0], %0 {strides = array<i32>} : memref<12x96xf32, #tpu.memory_space<vmem>>, vector<12x96xf32>,
    %c0_1 = arith.constant 0 : index
    %c0_2 = arith.constant 0 : index
    %2 = vector.load %arg2[%c0_1, %c0_2] : memref<96x16xf32, #tpu.memory_space<vmem>>, vector<96x16xf32>
    %c0_3 = arith.constant 0 : index
    %c0_4 = arith.constant 0 : index
    %c0_5 = arith.constant 0 : index
    %3 = vector.load %arg1[%c0_3, %c0_4, %c0_5] : memref<8x12x32xf32, #tpu.memory_space<vmem>>, vector<1x12x32xf32>
    %4 = vector.shape_cast %3 : vector<1x12x32xf32> to vector<12x32xf32>
    %5 = vector.extract_strided_slice %4 {offsets = [0, 0], sizes = [11, 32], strides = [1, 1]} : vector<12x32xf32> to vector<11x32xf32>
    %c1 = arith.constant 1 : index
    %c0_6 = arith.constant 0 : index
    %6 = vector.load %arg5[%c1, %c0_6] : memref<12x96xf32, #tpu.memory_space<vmem>>, vector<11x32xf32>
    tpu.vector_store %arg5[%c1, %c0_6], %5 {strides = array<i32>} : memref<12x96xf32, #tpu.memory_space<vmem>>, vector<11x32xf32>,
    %c0_7 = arith.constant 0 : index
    %c32 = arith.constant 32 : index
    %7 = vector.load %arg5[%c0_7, %c32] : memref<12x96xf32, #tpu.memory_space<vmem>>, vector<12x32xf32>
    tpu.vector_store %arg5[%c0_7, %c32], %4 {strides = array<i32>} : memref<12x96xf32, #tpu.memory_space<vmem>>, vector<12x32xf32>,
    %8 = vector.extract_strided_slice %4 {offsets = [1, 0], sizes = [11, 32], strides = [1, 1]} : vector<12x32xf32> to vector<11x32xf32>
    %c0_8 = arith.constant 0 : index
    %c64 = arith.constant 64 : index
    %9 = vector.load %arg5[%c0_8, %c64] : memref<12x96xf32, #tpu.memory_space<vmem>>, vector<11x32xf32>
    tpu.vector_store %arg5[%c0_8, %c64], %8 {strides = array<i32>} : memref<12x96xf32, #tpu.memory_space<vmem>>, vector<11x32xf32>,
    %c0_9 = arith.constant 0 : index
    %c0_10 = arith.constant 0 : index
    %10 = vector.load %arg5[%c0_9, %c0_10] : memref<12x96xf32, #tpu.memory_space<vmem>>, vector<12x96xf32>
    %cst_11 = arith.constant dense<0.000000e+00> : vector<12x16xf32>
    %11 = tpu.matmul %10, %2, %cst_11 {dimension_numbers = #tpu.dot_dimension_numbers<[1], [0], [0], [1], [0, 0, 1, 1], [], []>} : vector<12x96xf32>, vector<96x16xf32>, vector<12x16xf32> -> vector<12x16xf32>
    %cst_12 = arith.constant dense<0xFF800000> : vector<16xf32>
    %12 = vector.multi_reduction <maximumf>, %11, %cst_12 [0] : vector<12x16xf32> to vector<16xf32>
    %13 = vector.shape_cast %12 : vector<16xf32> to vector<1x16xf32>
    %c0_13 = arith.constant 0 : index
    %c0_14 = arith.constant 0 : index
    %14 = vector.load %arg6[%c0_13, %c0_14] : memref<8x16xf32, #tpu.memory_space<vmem>>, vector<1x16xf32>
    tpu.vector_store %arg6[%c0_13, %c0_14], %13 {strides = array<i32>} : memref<8x16xf32, #tpu.memory_space<vmem>>, vector<1x16xf32>,
    %c1_15 = arith.constant 1 : index
    %c0_16 = arith.constant 0 : index
    %c0_17 = arith.constant 0 : index
    %15 = vector.load %arg1[%c1_15, %c0_16, %c0_17] : memref<8x12x32xf32, #tpu.memory_space<vmem>>, vector<1x12x32xf32>
    %16 = vector.shape_cast %15 : vector<1x12x32xf32> to vector<12x32xf32>
    %17 = vector.extract_strided_slice %16 {offsets = [0, 0], sizes = [11, 32], strides = [1, 1]} : vector<12x32xf32> to vector<11x32xf32>
    %c1_18 = arith.constant 1 : index
    %c0_19 = arith.constant 0 : index
    %18 = vector.load %arg5[%c1_18, %c0_19] : memref<12x96xf32, #tpu.memory_space<vmem>>, vector<11x32xf32>
    tpu.vector_store %arg5[%c1_18, %c0_19], %17 {strides = array<i32>} : memref<12x96xf32, #tpu.memory_space<vmem>>, vector<11x32xf32>,
    %c0_20 = arith.constant 0 : index
    %c32_21 = arith.constant 32 : index
    %19 = vector.load %arg5[%c0_20, %c32_21] : memref<12x96xf32, #tpu.memory_space<vmem>>, vector<12x32xf32>
    tpu.vector_store %arg5[%c0_20, %c32_21], %16 {strides = array<i32>} : memref<12x96xf32, #tpu.memory_space<vmem>>, vector<12x32xf32>,
    %20 = vector.extract_strided_slice %16 {offsets = [1, 0], sizes = [11, 32], strides = [1, 1]} : vector<12x32xf32> to vector<11x32xf32>
    %c0_22 = arith.constant 0 : index
    %c64_23 = arith.constant 64 : index
    %21 = vector.load %arg5[%c0_22, %c64_23] : memref<12x96xf32, #tpu.memory_space<vmem>>, vector<11x32xf32>
    tpu.vector_store %arg5[%c0_22, %c64_23], %20 {strides = array<i32>} : memref<12x96xf32, #tpu.memory_space<vmem>>, vector<11x32xf32>,
    %c0_24 = arith.constant 0 : index
    %c0_25 = arith.constant 0 : index
    %22 = vector.load %arg5[%c0_24, %c0_25] : memref<12x96xf32, #tpu.memory_space<vmem>>, vector<12x96xf32>
    %cst_26 = arith.constant dense<0.000000e+00> : vector<12x16xf32>
    %23 = tpu.matmul %22, %2, %cst_26 {dimension_numbers = #tpu.dot_dimension_numbers<[1], [0], [0], [1], [0, 0, 1, 1], [], []>} : vector<12x96xf32>, vector<96x16xf32>, vector<12x16xf32> -> vector<12x16xf32>
    %cst_27 = arith.constant dense<0xFF800000> : vector<16xf32>
    %24 = vector.multi_reduction <maximumf>, %23, %cst_27 [0] : vector<12x16xf32> to vector<16xf32>
    %25 = vector.shape_cast %24 : vector<16xf32> to vector<1x16xf32>
    %c1_28 = arith.constant 1 : index
    %c0_29 = arith.constant 0 : index
    %26 = vector.load %arg6[%c1_28, %c0_29] : memref<8x16xf32, #tpu.memory_space<vmem>>, vector<1x16xf32>
    tpu.vector_store %arg6[%c1_28, %c0_29], %25 {strides = array<i32>} : memref<8x16xf32, #tpu.memory_space<vmem>>, vector<1x16xf32>,
    %c2 = arith.constant 2 : index
    %c0_30 = arith.constant 0 : index
    %c0_31 = arith.constant 0 : index
    %27 = vector.load %arg1[%c2, %c0_30, %c0_31] : memref<8x12x32xf32, #tpu.memory_space<vmem>>, vector<1x12x32xf32>
    %28 = vector.shape_cast %27 : vector<1x12x32xf32> to vector<12x32xf32>
    %29 = vector.extract_strided_slice %28 {offsets = [0, 0], sizes = [11, 32], strides = [1, 1]} : vector<12x32xf32> to vector<11x32xf32>
    %c1_32 = arith.constant 1 : index
    %c0_33 = arith.constant 0 : index
    %30 = vector.load %arg5[%c1_32, %c0_33] : memref<12x96xf32, #tpu.memory_space<vmem>>, vector<11x32xf32>
    tpu.vector_store %arg5[%c1_32, %c0_33], %29 {strides = array<i32>} : memref<12x96xf32, #tpu.memory_space<vmem>>, vector<11x32xf32>,
    %c0_34 = arith.constant 0 : index
    %c32_35 = arith.constant 32 : index
    %31 = vector.load %arg5[%c0_34, %c32_35] : memref<12x96xf32, #tpu.memory_space<vmem>>, vector<12x32xf32>
    tpu.vector_store %arg5[%c0_34, %c32_35], %28 {strides = array<i32>} : memref<12x96xf32, #tpu.memory_space<vmem>>, vector<12x32xf32>,
    %32 = vector.extract_strided_slice %28 {offsets = [1, 0], sizes = [11, 32], strides = [1, 1]} : vector<12x32xf32> to vector<11x32xf32>
    %c0_36 = arith.constant 0 : index
    %c64_37 = arith.constant 64 : index
    %33 = vector.load %arg5[%c0_36, %c64_37] : memref<12x96xf32, #tpu.memory_space<vmem>>, vector<11x32xf32>
    tpu.vector_store %arg5[%c0_36, %c64_37], %32 {strides = array<i32>} : memref<12x96xf32, #tpu.memory_space<vmem>>, vector<11x32xf32>,
    %c0_38 = arith.constant 0 : index
    %c0_39 = arith.constant 0 : index
    %34 = vector.load %arg5[%c0_38, %c0_39] : memref<12x96xf32, #tpu.memory_space<vmem>>, vector<12x96xf32>
    %cst_40 = arith.constant dense<0.000000e+00> : vector<12x16xf32>
    %35 = tpu.matmul %34, %2, %cst_40 {dimension_numbers = #tpu.dot_dimension_numbers<[1], [0], [0], [1], [0, 0, 1, 1], [], []>} : vector<12x96xf32>, vector<96x16xf32>, vector<12x16xf32> -> vector<12x16xf32>
    %cst_41 = arith.constant dense<0xFF800000> : vector<16xf32>
    %36 = vector.multi_reduction <maximumf>, %35, %cst_41 [0] : vector<12x16xf32> to vector<16xf32>
    %37 = vector.shape_cast %36 : vector<16xf32> to vector<1x16xf32>
    %c2_42 = arith.constant 2 : index
    %c0_43 = arith.constant 0 : index
    %38 = vector.load %arg6[%c2_42, %c0_43] : memref<8x16xf32, #tpu.memory_space<vmem>>, vector<1x16xf32>
    tpu.vector_store %arg6[%c2_42, %c0_43], %37 {strides = array<i32>} : memref<8x16xf32, #tpu.memory_space<vmem>>, vector<1x16xf32>,
    %c3 = arith.constant 3 : index
    %c0_44 = arith.constant 0 : index
    %c0_45 = arith.constant 0 : index
    %39 = vector.load %arg1[%c3, %c0_44, %c0_45] : memref<8x12x32xf32, #tpu.memory_space<vmem>>, vector<1x12x32xf32>
    %40 = vector.shape_cast %39 : vector<1x12x32xf32> to vector<12x32xf32>
    %41 = vector.extract_strided_slice %40 {offsets = [0, 0], sizes = [11, 32], strides = [1, 1]} : vector<12x32xf32> to vector<11x32xf32>
    %c1_46 = arith.constant 1 : index
    %c0_47 = arith.constant 0 : index
    %42 = vector.load %arg5[%c1_46, %c0_47] : memref<12x96xf32, #tpu.memory_space<vmem>>, vector<11x32xf32>
    tpu.vector_store %arg5[%c1_46, %c0_47], %41 {strides = array<i32>} : memref<12x96xf32, #tpu.memory_space<vmem>>, vector<11x32xf32>,
    %c0_48 = arith.constant 0 : index
    %c32_49 = arith.constant 32 : index
    %43 = vector.load %arg5[%c0_48, %c32_49] : memref<12x96xf32, #tpu.memory_space<vmem>>, vector<12x32xf32>
    tpu.vector_store %arg5[%c0_48, %c32_49], %40 {strides = array<i32>} : memref<12x96xf32, #tpu.memory_space<vmem>>, vector<12x32xf32>,
    %44 = vector.extract_strided_slice %40 {offsets = [1, 0], sizes = [11, 32], strides = [1, 1]} : vector<12x32xf32> to vector<11x32xf32>
    %c0_50 = arith.constant 0 : index
    %c64_51 = arith.constant 64 : index
    %45 = vector.load %arg5[%c0_50, %c64_51] : memref<12x96xf32, #tpu.memory_space<vmem>>, vector<11x32xf32>
    tpu.vector_store %arg5[%c0_50, %c64_51], %44 {strides = array<i32>} : memref<12x96xf32, #tpu.memory_space<vmem>>, vector<11x32xf32>,
    %c0_52 = arith.constant 0 : index
    %c0_53 = arith.constant 0 : index
    %46 = vector.load %arg5[%c0_52, %c0_53] : memref<12x96xf32, #tpu.memory_space<vmem>>, vector<12x96xf32>
    %cst_54 = arith.constant dense<0.000000e+00> : vector<12x16xf32>
    %47 = tpu.matmul %46, %2, %cst_54 {dimension_numbers = #tpu.dot_dimension_numbers<[1], [0], [0], [1], [0, 0, 1, 1], [], []>} : vector<12x96xf32>, vector<96x16xf32>, vector<12x16xf32> -> vector<12x16xf32>
    %cst_55 = arith.constant dense<0xFF800000> : vector<16xf32>
    %48 = vector.multi_reduction <maximumf>, %47, %cst_55 [0] : vector<12x16xf32> to vector<16xf32>
    %49 = vector.shape_cast %48 : vector<16xf32> to vector<1x16xf32>
    %c3_56 = arith.constant 3 : index
    %c0_57 = arith.constant 0 : index
    %50 = vector.load %arg6[%c3_56, %c0_57] : memref<8x16xf32, #tpu.memory_space<vmem>>, vector<1x16xf32>
    tpu.vector_store %arg6[%c3_56, %c0_57], %49 {strides = array<i32>} : memref<8x16xf32, #tpu.memory_space<vmem>>, vector<1x16xf32>,
    %c4 = arith.constant 4 : index
    %c0_58 = arith.constant 0 : index
    %c0_59 = arith.constant 0 : index
    %51 = vector.load %arg1[%c4, %c0_58, %c0_59] : memref<8x12x32xf32, #tpu.memory_space<vmem>>, vector<1x12x32xf32>
    %52 = vector.shape_cast %51 : vector<1x12x32xf32> to vector<12x32xf32>
    %53 = vector.extract_strided_slice %52 {offsets = [0, 0], sizes = [11, 32], strides = [1, 1]} : vector<12x32xf32> to vector<11x32xf32>
    %c1_60 = arith.constant 1 : index
    %c0_61 = arith.constant 0 : index
    %54 = vector.load %arg5[%c1_60, %c0_61] : memref<12x96xf32, #tpu.memory_space<vmem>>, vector<11x32xf32>
    tpu.vector_store %arg5[%c1_60, %c0_61], %53 {strides = array<i32>} : memref<12x96xf32, #tpu.memory_space<vmem>>, vector<11x32xf32>,
    %c0_62 = arith.constant 0 : index
    %c32_63 = arith.constant 32 : index
    %55 = vector.load %arg5[%c0_62, %c32_63] : memref<12x96xf32, #tpu.memory_space<vmem>>, vector<12x32xf32>
    tpu.vector_store %arg5[%c0_62, %c32_63], %52 {strides = array<i32>} : memref<12x96xf32, #tpu.memory_space<vmem>>, vector<12x32xf32>,
    %56 = vector.extract_strided_slice %52 {offsets = [1, 0], sizes = [11, 32], strides = [1, 1]} : vector<12x32xf32> to vector<11x32xf32>
    %c0_64 = arith.constant 0 : index
    %c64_65 = arith.constant 64 : index
    %57 = vector.load %arg5[%c0_64, %c64_65] : memref<12x96xf32, #tpu.memory_space<vmem>>, vector<11x32xf32>
    tpu.vector_store %arg5[%c0_64, %c64_65], %56 {strides = array<i32>} : memref<12x96xf32, #tpu.memory_space<vmem>>, vector<11x32xf32>,
    %c0_66 = arith.constant 0 : index
    %c0_67 = arith.constant 0 : index
    %58 = vector.load %arg5[%c0_66, %c0_67] : memref<12x96xf32, #tpu.memory_space<vmem>>, vector<12x96xf32>
    %cst_68 = arith.constant dense<0.000000e+00> : vector<12x16xf32>
    %59 = tpu.matmul %58, %2, %cst_68 {dimension_numbers = #tpu.dot_dimension_numbers<[1], [0], [0], [1], [0, 0, 1, 1], [], []>} : vector<12x96xf32>, vector<96x16xf32>, vector<12x16xf32> -> vector<12x16xf32>
    %cst_69 = arith.constant dense<0xFF800000> : vector<16xf32>
    %60 = vector.multi_reduction <maximumf>, %59, %cst_69 [0] : vector<12x16xf32> to vector<16xf32>
    %61 = vector.shape_cast %60 : vector<16xf32> to vector<1x16xf32>
    %c4_70 = arith.constant 4 : index
    %c0_71 = arith.constant 0 : index
    %62 = vector.load %arg6[%c4_70, %c0_71] : memref<8x16xf32, #tpu.memory_space<vmem>>, vector<1x16xf32>
    tpu.vector_store %arg6[%c4_70, %c0_71], %61 {strides = array<i32>} : memref<8x16xf32, #tpu.memory_space<vmem>>, vector<1x16xf32>,
    %c5 = arith.constant 5 : index
    %c0_72 = arith.constant 0 : index
    %c0_73 = arith.constant 0 : index
    %63 = vector.load %arg1[%c5, %c0_72, %c0_73] : memref<8x12x32xf32, #tpu.memory_space<vmem>>, vector<1x12x32xf32>
    %64 = vector.shape_cast %63 : vector<1x12x32xf32> to vector<12x32xf32>
    %65 = vector.extract_strided_slice %64 {offsets = [0, 0], sizes = [11, 32], strides = [1, 1]} : vector<12x32xf32> to vector<11x32xf32>
    %c1_74 = arith.constant 1 : index
    %c0_75 = arith.constant 0 : index
    %66 = vector.load %arg5[%c1_74, %c0_75] : memref<12x96xf32, #tpu.memory_space<vmem>>, vector<11x32xf32>
    tpu.vector_store %arg5[%c1_74, %c0_75], %65 {strides = array<i32>} : memref<12x96xf32, #tpu.memory_space<vmem>>, vector<11x32xf32>,
    %c0_76 = arith.constant 0 : index
    %c32_77 = arith.constant 32 : index
    %67 = vector.load %arg5[%c0_76, %c32_77] : memref<12x96xf32, #tpu.memory_space<vmem>>, vector<12x32xf32>
    tpu.vector_store %arg5[%c0_76, %c32_77], %64 {strides = array<i32>} : memref<12x96xf32, #tpu.memory_space<vmem>>, vector<12x32xf32>,
    %68 = vector.extract_strided_slice %64 {offsets = [1, 0], sizes = [11, 32], strides = [1, 1]} : vector<12x32xf32> to vector<11x32xf32>
    %c0_78 = arith.constant 0 : index
    %c64_79 = arith.constant 64 : index
    %69 = vector.load %arg5[%c0_78, %c64_79] : memref<12x96xf32, #tpu.memory_space<vmem>>, vector<11x32xf32>
    tpu.vector_store %arg5[%c0_78, %c64_79], %68 {strides = array<i32>} : memref<12x96xf32, #tpu.memory_space<vmem>>, vector<11x32xf32>,
    %c0_80 = arith.constant 0 : index
    %c0_81 = arith.constant 0 : index
    %70 = vector.load %arg5[%c0_80, %c0_81] : memref<12x96xf32, #tpu.memory_space<vmem>>, vector<12x96xf32>
    %cst_82 = arith.constant dense<0.000000e+00> : vector<12x16xf32>
    %71 = tpu.matmul %70, %2, %cst_82 {dimension_numbers = #tpu.dot_dimension_numbers<[1], [0], [0], [1], [0, 0, 1, 1], [], []>} : vector<12x96xf32>, vector<96x16xf32>, vector<12x16xf32> -> vector<12x16xf32>
    %cst_83 = arith.constant dense<0xFF800000> : vector<16xf32>
    %72 = vector.multi_reduction <maximumf>, %71, %cst_83 [0] : vector<12x16xf32> to vector<16xf32>
    %73 = vector.shape_cast %72 : vector<16xf32> to vector<1x16xf32>
    %c5_84 = arith.constant 5 : index
    %c0_85 = arith.constant 0 : index
    %74 = vector.load %arg6[%c5_84, %c0_85] : memref<8x16xf32, #tpu.memory_space<vmem>>, vector<1x16xf32>
    tpu.vector_store %arg6[%c5_84, %c0_85], %73 {strides = array<i32>} : memref<8x16xf32, #tpu.memory_space<vmem>>, vector<1x16xf32>,
    %c6 = arith.constant 6 : index
    %c0_86 = arith.constant 0 : index
    %c0_87 = arith.constant 0 : index
    %75 = vector.load %arg1[%c6, %c0_86, %c0_87] : memref<8x12x32xf32, #tpu.memory_space<vmem>>, vector<1x12x32xf32>
    %76 = vector.shape_cast %75 : vector<1x12x32xf32> to vector<12x32xf32>
    %77 = vector.extract_strided_slice %76 {offsets = [0, 0], sizes = [11, 32], strides = [1, 1]} : vector<12x32xf32> to vector<11x32xf32>
    %c1_88 = arith.constant 1 : index
    %c0_89 = arith.constant 0 : index
    %78 = vector.load %arg5[%c1_88, %c0_89] : memref<12x96xf32, #tpu.memory_space<vmem>>, vector<11x32xf32>
    tpu.vector_store %arg5[%c1_88, %c0_89], %77 {strides = array<i32>} : memref<12x96xf32, #tpu.memory_space<vmem>>, vector<11x32xf32>,
    %c0_90 = arith.constant 0 : index
    %c32_91 = arith.constant 32 : index
    %79 = vector.load %arg5[%c0_90, %c32_91] : memref<12x96xf32, #tpu.memory_space<vmem>>, vector<12x32xf32>
    tpu.vector_store %arg5[%c0_90, %c32_91], %76 {strides = array<i32>} : memref<12x96xf32, #tpu.memory_space<vmem>>, vector<12x32xf32>,
    %80 = vector.extract_strided_slice %76 {offsets = [1, 0], sizes = [11, 32], strides = [1, 1]} : vector<12x32xf32> to vector<11x32xf32>
    %c0_92 = arith.constant 0 : index
    %c64_93 = arith.constant 64 : index
    %81 = vector.load %arg5[%c0_92, %c64_93] : memref<12x96xf32, #tpu.memory_space<vmem>>, vector<11x32xf32>
    tpu.vector_store %arg5[%c0_92, %c64_93], %80 {strides = array<i32>} : memref<12x96xf32, #tpu.memory_space<vmem>>, vector<11x32xf32>,
    %c0_94 = arith.constant 0 : index
    %c0_95 = arith.constant 0 : index
    %82 = vector.load %arg5[%c0_94, %c0_95] : memref<12x96xf32, #tpu.memory_space<vmem>>, vector<12x96xf32>
    %cst_96 = arith.constant dense<0.000000e+00> : vector<12x16xf32>
    %83 = tpu.matmul %82, %2, %cst_96 {dimension_numbers = #tpu.dot_dimension_numbers<[1], [0], [0], [1], [0, 0, 1, 1], [], []>} : vector<12x96xf32>, vector<96x16xf32>, vector<12x16xf32> -> vector<12x16xf32>
    %cst_97 = arith.constant dense<0xFF800000> : vector<16xf32>
    %84 = vector.multi_reduction <maximumf>, %83, %cst_97 [0] : vector<12x16xf32> to vector<16xf32>
    %85 = vector.shape_cast %84 : vector<16xf32> to vector<1x16xf32>
    %c6_98 = arith.constant 6 : index
    %c0_99 = arith.constant 0 : index
    %86 = vector.load %arg6[%c6_98, %c0_99] : memref<8x16xf32, #tpu.memory_space<vmem>>, vector<1x16xf32>
    tpu.vector_store %arg6[%c6_98, %c0_99], %85 {strides = array<i32>} : memref<8x16xf32, #tpu.memory_space<vmem>>, vector<1x16xf32>,
    %c7 = arith.constant 7 : index
    %c0_100 = arith.constant 0 : index
    %c0_101 = arith.constant 0 : index
    %87 = vector.load %arg1[%c7, %c0_100, %c0_101] : memref<8x12x32xf32, #tpu.memory_space<vmem>>, vector<1x12x32xf32>
    %88 = vector.shape_cast %87 : vector<1x12x32xf32> to vector<12x32xf32>
    %89 = vector.extract_strided_slice %88 {offsets = [0, 0], sizes = [11, 32], strides = [1, 1]} : vector<12x32xf32> to vector<11x32xf32>
    %c1_102 = arith.constant 1 : index
    %c0_103 = arith.constant 0 : index
    %90 = vector.load %arg5[%c1_102, %c0_103] : memref<12x96xf32, #tpu.memory_space<vmem>>, vector<11x32xf32>
    tpu.vector_store %arg5[%c1_102, %c0_103], %89 {strides = array<i32>} : memref<12x96xf32, #tpu.memory_space<vmem>>, vector<11x32xf32>,
    %c0_104 = arith.constant 0 : index
    %c32_105 = arith.constant 32 : index
    %91 = vector.load %arg5[%c0_104, %c32_105] : memref<12x96xf32, #tpu.memory_space<vmem>>, vector<12x32xf32>
    tpu.vector_store %arg5[%c0_104, %c32_105], %88 {strides = array<i32>} : memref<12x96xf32, #tpu.memory_space<vmem>>, vector<12x32xf32>,
    %92 = vector.extract_strided_slice %88 {offsets = [1, 0], sizes = [11, 32], strides = [1, 1]} : vector<12x32xf32> to vector<11x32xf32>
    %c0_106 = arith.constant 0 : index
    %c64_107 = arith.constant 64 : index
    %93 = vector.load %arg5[%c0_106, %c64_107] : memref<12x96xf32, #tpu.memory_space<vmem>>, vector<11x32xf32>
    tpu.vector_store %arg5[%c0_106, %c64_107], %92 {strides = array<i32>} : memref<12x96xf32, #tpu.memory_space<vmem>>, vector<11x32xf32>,
    %c0_108 = arith.constant 0 : index
    %c0_109 = arith.constant 0 : index
    %94 = vector.load %arg5[%c0_108, %c0_109] : memref<12x96xf32, #tpu.memory_space<vmem>>, vector<12x96xf32>
    %cst_110 = arith.constant dense<0.000000e+00> : vector<12x16xf32>
    %95 = tpu.matmul %94, %2, %cst_110 {dimension_numbers = #tpu.dot_dimension_numbers<[1], [0], [0], [1], [0, 0, 1, 1], [], []>} : vector<12x96xf32>, vector<96x16xf32>, vector<12x16xf32> -> vector<12x16xf32>
    %cst_111 = arith.constant dense<0xFF800000> : vector<16xf32>
    %96 = vector.multi_reduction <maximumf>, %95, %cst_111 [0] : vector<12x16xf32> to vector<16xf32>
    %97 = vector.shape_cast %96 : vector<16xf32> to vector<1x16xf32>
    %c7_112 = arith.constant 7 : index
    %c0_113 = arith.constant 0 : index
    %98 = vector.load %arg6[%c7_112, %c0_113] : memref<8x16xf32, #tpu.memory_space<vmem>>, vector<1x16xf32>
    tpu.vector_store %arg6[%c7_112, %c0_113], %97 {strides = array<i32>} : memref<8x16xf32, #tpu.memory_space<vmem>>, vector<1x16xf32>,
    %c0_114 = arith.constant 0 : index
    %c0_115 = arith.constant 0 : index
    %99 = vector.load %arg6[%c0_114, %c0_115] : memref<8x16xf32, #tpu.memory_space<vmem>>, vector<8x16xf32>
    %c0_116 = arith.constant 0 : index
    %c0_117 = arith.constant 0 : index
    %100 = vector.load %arg3[%c0_116, %c0_117] : memref<1x16xf32, #tpu.memory_space<vmem>>, vector<1x16xf32>
    %101 = vector.broadcast %100 : vector<1x16xf32> to vector<8x16xf32>
    %102 = arith.addf %99, %101 : vector<8x16xf32>
    %cst_118 = arith.constant 0.000000e+00 : f32
    %103 = vector.broadcast %cst_118 : f32 to vector<8x16xf32>
    %104 = arith.maximumf %102, %103 : vector<8x16xf32>
    %c0_119 = arith.constant 0 : index
    %c0_120 = arith.constant 0 : index
    %105 = vector.load %arg4[%c0_119, %c0_120] : memref<8x16xf32, #tpu.memory_space<vmem>>, vector<8x16xf32>
    tpu.vector_store %arg4[%c0_119, %c0_120], %104 {strides = array<i32>} : memref<8x16xf32, #tpu.memory_space<vmem>>, vector<8x16xf32>,
    return
  }
  func.func @transform_0(%arg0: i32) -> (i32, i32, i32) {
    %c0_i32 = arith.constant 0 : i32
    %c0_i32_0 = arith.constant 0 : i32
    %c0_i32_1 = arith.constant 0 : i32
    return %arg0, %c0_i32, %c0_i32_0 : i32, i32, i32
  }
  func.func @transform_1(%arg0: i32) -> (i32, i32) {
    %c0_i32 = arith.constant 0 : i32
    %c0_i32_0 = arith.constant 0 : i32
    %c0_i32_1 = arith.constant 0 : i32
    return %c0_i32, %c0_i32_0 : i32, i32
  }
  func.func @transform_2(%arg0: i32) -> (i32, i32) {
    %c0_i32 = arith.constant 0 : i32
    %c0_i32_0 = arith.constant 0 : i32
    %c0_i32_1 = arith.constant 0 : i32
    return %c0_i32, %c0_i32_0 : i32, i32
  }
  func.func @transform_3(%arg0: i32) -> (i32, i32) {
    %c0_i32 = arith.constant 0 : i32
    %c0_i32_0 = arith.constant 0 : i32
    return %arg0, %c0_i32 : i32, i32
  }
}

</mosaic_0001>

<llo_original>
// kernel: tpu_custom_call.1
$region0: #{tpu_custom_call.1}
  #allocation0 [shape = 'u32[]', space=smem, size = 0x4, offset = 0x4, fixed_abs, tag = 'smem constant byte address 0x4 - core index']
  #allocation1 [shape = 'u32[72,128]{1,0:T(1,128)}', space=vmem, size = 0x9000, scoped, tag = 'internal scratch']
  #allocation2 [shape = 'f32[12,96]{1,0:T(8,128)}', space=vmem, size = 0x2000, scoped, tag = 'scratch operand']
  #allocation3 [shape = 'f32[8,16]{1,0:T(8,128)}', space=vmem, size = 0x1000, scoped, tag = 'scratch operand']
  %s0 = inlined_call_operand.vmem [shape: f32[16,12,32], index: 0, kind: input, shape index: {}]
  %s1 = inlined_call_operand.vmem [shape: f32[96,16], index: 1, kind: input, shape index: {}]
  %s2 = inlined_call_operand.vmem [shape: f32[1,16], index: 2, kind: input, shape index: {}]
  %s3 = inlined_call_operand.hbm [shape: f32[16,16], index: 3, kind: output, shape index: {}]
  %s4 = sld [smem:[#allocation0]]
  $region45: #{tpu_custom_call.1} parent=0
    _
  %s6 = ssub.s32 1, %s4
  %s7 = scalar_select 0, %s6, %s4
  $region1: #{tpu_custom_call.1} parent=0
    #allocation4 [shape = 'u8[8192]{0}', space=vmem, size = 0x2000, scoped, tag = 'output window, operand 0']
    #allocation5 [shape = 's32[2]{0}', space=sflag, size = 0x8, scoped, tag = 'scoped memory for tpu_custom_call.1']
    %8 = vsyncpa [#allocation5], 0
    %s9 = scalar_lea.sflag [#allocation5], 1
    %10 = vsyncpa %s9, 0
    loop: start=0, step=1, limit=4
    $region2: #{tpu_custom_call.1} parent=1 // loop_pre_header
      _
    $region3: #{tpu_custom_call.1} parent=1 // loop_header
      %s12 = sphi 0, %s16
      %p13 = scmp.ge.s32.totalorder %s12, 4
      %s22 = sphi 0, %s24
      %s25 = sphi 0, %s22
      %s26 = sphi 0, %s25
      %s42 = sphi 0, %s26
      %s46 = sphi 0, %s46
      %s48 = sphi 0, %s46
      %s49 = sphi 0, %s48
      %s63 = sphi 0, %s49
      %s67 = sphi 0, %s67
      %s69 = sphi 0, %s67
      %s70 = sphi 0, %s69
      %s84 = sphi 0, %s70
      %s90 = sphi 0, %s92
      %s93 = sphi 0, %s90
      %s94 = sphi 0, %s93
      %s110 = sphi 0, %s94
    $region4: #{tpu_custom_call.1} parent=1 // loop_header_branch
      %15 = sbr.rel (%p13) target = $region8
    $region5: #{tpu_custom_call.1} parent=1 // loop_body
      %s17 = ssub.s32 %s12, 1
      %s18 = ssub.s32 %s12, 2
      %s19 = sadd.s32 %s12, 1
      %s20 = ssub.s32 %s12, %s19
      %p21 = scmp.eq.s32.totalorder %s20, 0
      %s23 = sadd.s32 %s22, 1
      %s24 = scalar_select %p21, %s22, %s23
      %p27 = pneg %p21
      %p28 = scmp.eq.s32.totalorder %s12, 1
      %p29 = por %p27, %p28
      %p30 = scmp.ne.s32.totalorder %s22, %s25
      %p31 = scmp.eq.s32.totalorder %s12, 0
      %p32 = por %p30, %p31
      %p33 = scmp.ne.s32.totalorder %s22, %s25
      %p34 = scmp.eq.s32.totalorder %s17, 1
      %p35 = por %p33, %p34
      %p36 = scmp.ne.s32.totalorder %s25, %s26
      %p37 = scmp.eq.s32.totalorder %s17, 0
      %p38 = por %p36, %p37
      %p39 = scmp.ne.s32.totalorder %s25, %s26
      %p40 = scmp.eq.s32.totalorder %s18, 1
      %p41 = por %p39, %p40
      %p43 = scmp.ne.s32.totalorder %s26, %s42
      %p44 = scmp.eq.s32.totalorder %s18, 0
      %p45 = por %p43, %p44
      %s47 = sadd.s32 %s46, 1
      %p50 = scmp.eq.s32.totalorder %s12, 1
      %p51 = scmp.ne.s32.totalorder %s46, %s48
      %p52 = scmp.eq.s32.totalorder %s12, 0
      %p53 = por %p51, %p52
      %p54 = scmp.ne.s32.totalorder %s46, %s48
      %p55 = scmp.eq.s32.totalorder %s17, 1
      %p56 = por %p54, %p55
      %p57 = scmp.ne.s32.totalorder %s48, %s49
      %p58 = scmp.eq.s32.totalorder %s17, 0
      %p59 = por %p57, %p58
      %p60 = scmp.ne.s32.totalorder %s48, %s49
      %p61 = scmp.eq.s32.totalorder %s18, 1
      %p62 = por %p60, %p61
      %p64 = scmp.ne.s32.totalorder %s49, %s63
      %p65 = scmp.eq.s32.totalorder %s18, 0
      %p66 = por %p64, %p65
      %s68 = sadd.s32 %s67, 1
      %p71 = scmp.eq.s32.totalorder %s12, 1
      %p72 = scmp.ne.s32.totalorder %s67, %s69
      %p73 = scmp.eq.s32.totalorder %s12, 0
      %p74 = por %p72, %p73
      %p75 = scmp.ne.s32.totalorder %s67, %s69
      %p76 = scmp.eq.s32.totalorder %s17, 1
      %p77 = por %p75, %p76
      %p78 = scmp.ne.s32.totalorder %s69, %s70
      %p79 = scmp.eq.s32.totalorder %s17, 0
      %p80 = por %p78, %p79
      %p81 = scmp.ne.s32.totalorder %s69, %s70
      %p82 = scmp.eq.s32.totalorder %s18, 1
      %p83 = por %p81, %p82
      %p85 = scmp.ne.s32.totalorder %s70, %s84
      %p86 = scmp.eq.s32.totalorder %s18, 0
      %p87 = por %p85, %p86
      %s88 = ssub.s32 %s12, %s19
      %p89 = scmp.eq.s32.totalorder %s88, 0
      %s91 = sadd.s32 %s90, 1
      %s92 = scalar_select %p89, %s90, %s91
      %p95 = pneg %p89
      %p96 = scmp.eq.s32.totalorder %s12, 1
      %p97 = por %p95, %p96
      %p98 = scmp.ne.s32.totalorder %s90, %s93
      %p99 = scmp.eq.s32.totalorder %s12, 0
      %p100 = por %p98, %p99
      %p101 = scmp.ne.s32.totalorder %s90, %s93
      %p102 = scmp.eq.s32.totalorder %s17, 1
      %p103 = por %p101, %p102
      %p104 = scmp.ne.s32.totalorder %s93, %s94
      %p105 = scmp.eq.s32.totalorder %s17, 0
      %p106 = por %p104, %p105
      %p107 = scmp.ne.s32.totalorder %s93, %s94
      %p108 = scmp.eq.s32.totalorder %s18, 1
      %p109 = por %p107, %p108
      %p111 = scmp.ne.s32.totalorder %s94, %s110
      %p112 = scmp.eq.s32.totalorder %s18, 0
      %p113 = por %p111, %p112
      %p114 = scmp.le.s32.totalorder 1, %s12
      %p115 = scmp.lt.s32.totalorder %s12, 3
      %p116 = pnand %p114, %p115
      %p117 = pneg %p116
      // Predicated region
      $region9: #{tpu_custom_call.1} parent=5 // pred_check
        _
      $region10: #{tpu_custom_call.1} parent=5 // pred_check_branch
        %119 = sbr.rel (%p116) target = $region12
      $region11: #{tpu_custom_call.1} parent=5 // pred_region
        %s120 = ssub.s32 %s12, 1
        // Predicated region
        $region13: #{tpu_custom_call.1} parent=11 // pred_check
          %p121 = pneg %p59
        $region14: #{tpu_custom_call.1} parent=11 // pred_check_branch
          %123 = sbr.rel (%p121) target = $region16
        $region15: #{tpu_custom_call.1} parent=11 // pred_region
          _
        $region16: #{tpu_custom_call.1} parent=11 // pred_fallthru
          _
        // Predicated region
        $region17: #{tpu_custom_call.1} parent=11 // pred_check
          %p124 = pneg %p80
        $region18: #{tpu_custom_call.1} parent=11 // pred_check_branch
          %126 = sbr.rel (%p124) target = $region20
        $region19: #{tpu_custom_call.1} parent=11 // pred_region
          _
        $region20: #{tpu_custom_call.1} parent=11 // pred_fallthru
          _
      $region12: #{tpu_custom_call.1} parent=5 // pred_fallthru
        _
      %p127 = scmp.lt.s32.totalorder %s12, 2
      // Predicated region
      $region21: #{tpu_custom_call.1} parent=5 // pred_check
        %p128 = pneg %p127
      $region22: #{tpu_custom_call.1} parent=5 // pred_check_branch
        %130 = sbr.rel (%p128) target = $region24
      $region23: #{tpu_custom_call.1} parent=5 // pred_region
        // Predicated region
        $region25: #{tpu_custom_call.1} parent=23 // pred_check
          %p131 = pneg %p32
        $region26: #{tpu_custom_call.1} parent=23 // pred_check_branch
          %133 = sbr.rel (%p131) target = $region28
        $region27: #{tpu_custom_call.1} parent=23 // pred_region
          %s134 = smul.u32 8, %s12
          %p135 = scmp.lt.s32.totalorder %s134, 15
          %s136 = scalar_select %p135, %s134, 15
          %s137 = smul.addr %s136, 2
          %s138 = smul.addr %s137, 8
          %s139 = scalar_lea.vmem %s0, %s138
          %s140 = smul.u32 8, %s12
        $region28: #{tpu_custom_call.1} parent=23 // pred_fallthru
          _
      $region24: #{tpu_custom_call.1} parent=5 // pred_fallthru
        _
      %p141 = scmp.le.s32.totalorder 1, %s12
      %p142 = scmp.lt.s32.totalorder %s12, 3
      %p143 = pnand %p141, %p142
      %p144 = pneg %p143
      // Predicated region
      $region29: #{tpu_custom_call.1} parent=5 // pred_check
        _
      $region30: #{tpu_custom_call.1} parent=5 // pred_check_branch
        %146 = sbr.rel (%p143) target = $region32
      $region31: #{tpu_custom_call.1} parent=5 // pred_region
        %s147 = ssub.s32 %s12, 1
        %s148 = smul.u32 8, %s17
        %p149 = scmp.lt.s32.totalorder %s148, 15
        %s150 = scalar_select %p149, %s148, 15
        %s151 = smul.addr %s150, 2
        %s152 = smul.addr %s151, 8
        %s153 = scalar_lea.vmem %s0, %s152
        %p154 = pneg %p38
        %p155 = pneg %p35
        %p156 = pneg %p59
        %p157 = pneg %p56
        %p158 = pneg %p80
        %p159 = pneg %p77
        %p160 = pneg %p106
        %p161 = pneg %p103
        %s162 = sand.u32 %s93, 1
        %s163 = scalar_lea.sflag [#allocation5], %s162
        %s164 = sand.u32 %s93, 1
        %s165 = smul.addr %s164, 8
        %s166 = scalar_lea.vmem [#allocation4], %s165
        %s167 = smul.u32 8, %s17
        %p168 = scmp.lt.s32.totalorder %s167, 15
        %s169 = scalar_select %p168, %s167, 15
        %s170 = smul.addr %s169, 2
        %s171 = smul.addr %s170, 8
        %s172 = scalar_lea.vmem %s0, %s171
        %s173 = smul.u32 8, %s17
        %vm174 = vcmask 785408
        %175 = vst.msk [vmem:[#allocation2] sm:$0xff] %vm174, 0.0
        %vm176 = vcmask 781312
        %177 = vst.msk [vmem:[#allocation2 + $0x8] sm:$0xf] %vm176, 0.0
        %v178 = vld [vmem:[%s1] sm:$0xff]
        %v179 = vld [vmem:[%s1 + $0x8] sm:$0xff]
        %v180 = vld [vmem:[%s1 + $0x10] sm:$0xff]
        %v181 = vld [vmem:[%s1 + $0x18] sm:$0xff]
        %v182 = vld [vmem:[%s1 + $0x20] sm:$0xff]
        %v183 = vld [vmem:[%s1 + $0x28] sm:$0xff]
        %v184 = vld [vmem:[%s1 + $0x30] sm:$0xff]
        %v185 = vld [vmem:[%s1 + $0x38] sm:$0xff]
        %v186 = vld [vmem:[%s1 + $0x40] sm:$0xff]
        %v187 = vld [vmem:[%s1 + $0x48] sm:$0xff]
        %v188 = vld [vmem:[%s1 + $0x50] sm:$0xff]
        %v189 = vld [vmem:[%s1 + $0x58] sm:$0xff]
        %v190 = vld [vmem:[%s172] sm:$0xff]
        %v191 = vld [vmem:[%s172 + $0x8] sm:$0xf]
        %vm192 = vcmask 261120
        %193 = vst.msk [vmem:[#allocation2 + $0x1] sm:$0xff] %vm192, %v190
        %vm194 = vcmask 256000
        %195 = vst.msk [vmem:[#allocation2 + $0x9] sm:$0x7] %vm194, %v191
        %198 = vrot.lane.b32.xlu0 %v190, 32
        %v199 = vpop.permute.xlu0 %198
        %200 = vrot.lane.b32.xlu0 %v191, 32
        %v201 = vpop.permute.xlu0 %200
        %vm204 = vcmask 523520
        %205 = vst.msk [vmem:[#allocation2] sm:$0xff] %vm204, %v199
        %vm206 = vcmask 519424
        %207 = vst.msk [vmem:[#allocation2 + $0x8] sm:$0xf] %vm206, %v201
        %208 = vrot.lane.b32.xlu0 %v190, 64
        %v209 = vpop.permute.xlu0 %208
        %210 = vrot.lane.b32.xlu0 %v191, 64
        %v211 = vpop.permute.xlu0 %210
        %vm214 = vcmask 785921
        %215 = vst.msk [vmem:[#allocation2 - $0x1] sm:$0xfe] %vm214, %v209
        %vm216 = vcmask 781824
        %217 = vst.msk [vmem:[#allocation2 + $0x7] sm:$0xf] %vm216, %v211
        %v218 = vld [vmem:[#allocation2] sm:$0xff]
        %v219 = vld [vmem:[#allocation2 + $0x8] sm:$0xf]
        %v221 = vsel %vm174, %v218, 0
        %v224 = vsel %vm174, %v219, 0
        %226 = vmatpush.msra.mxu0 0.0
        %227 = vmatpush.msra.mxu0 0.0
        %228 = vmatpush.msra.mxu0 0.0
        %229 = vmatpush.msra.mxu0 0.0
        %230 = vmatpush.msra.mxu0 %v189
        %231 = vmatpush.msra.mxu0 %v188
        %232 = vmatpush.msra.mxu0 %v187
        %233 = vmatpush.msra.mxu0 %v186
        %234 = vmatpush.msra.mxu0 %v185
        %235 = vmatpush.msra.mxu0 %v184
        %236 = vmatpush.msra.mxu0 %v183
        %237 = vmatpush.msra.mxu0 %v182
        %238 = vmatpush.msra.mxu0 %v181
        %239 = vmatpush.msra.mxu0 %v180
        %240 = vmatpush.msra.mxu0 %v179
        %241 = vmatpush.msra.mxu0 %v178
        %242 = vmatmul.f32.gmra.mxu0 %v221
        %v243 = vpop.f32.mrf.mxu0
        %v244 = vadd.f32 0.0, %v243
        %245 = vmatmul.f32.gmra.mxu0 %v224
        %v246 = vpop.f32.mrf.mxu0
        %v247 = vadd.f32 0.0, %v246
        %248 = vdwg.mxu0
        %vm249 = vcmask 130048
        %v250 = vsel %vm249, %v244, -inf
        %vm251 = vcmask 125952
        %v252 = vsel %vm251, %v247, -inf
        %v253 = vmax.f32 %v250, %v252
        %v254 = vrot.slane %v253, 4
        %v255 = vmax.f32 %v253, %v254
        %v256 = vrot.slane %v255, 2
        %v257 = vmax.f32 %v255, %v256
        %v258 = vrot.slane %v257, 1
        %v259 = vmax.f32 %v257, %v258
        %vm260 = vcmask 122880
        %261 = vst.msk [vmem:[#allocation3] sm:$0x1] %vm260, %v259
        %s262 = scalar_lea.vmem %s172, 16
        %v263 = vld [vmem:[%s262] sm:$0xff]
        %v264 = vld [vmem:[%s262 + $0x8] sm:$0xf]
        %265 = vst.msk [vmem:[#allocation2 + $0x1] sm:$0xff] %vm192, %v263
        %266 = vst.msk [vmem:[#allocation2 + $0x9] sm:$0x7] %vm194, %v264
        %269 = vrot.lane.b32.xlu0 %v263, 32
        %v270 = vpop.permute.xlu0 %269
        %271 = vrot.lane.b32.xlu0 %v264, 32
        %v272 = vpop.permute.xlu0 %271
        %275 = vst.msk [vmem:[#allocation2] sm:$0xff] %vm204, %v270
        %276 = vst.msk [vmem:[#allocation2 + $0x8] sm:$0xf] %vm206, %v272
        %277 = vrot.lane.b32.xlu0 %v263, 64
        %v278 = vpop.permute.xlu0 %277
        %279 = vrot.lane.b32.xlu0 %v264, 64
        %v280 = vpop.permute.xlu0 %279
        %283 = vst.msk [vmem:[#allocation2 - $0x1] sm:$0xfe] %vm214, %v278
        %284 = vst.msk [vmem:[#allocation2 + $0x7] sm:$0xf] %vm216, %v280
        %v285 = vld [vmem:[#allocation2] sm:$0xff]
        %v286 = vld [vmem:[#allocation2 + $0x8] sm:$0xf]
        %v288 = vsel %vm174, %v285, 0
        %v291 = vsel %vm174, %v286, 0
        %293 = vmatpush.msra.mxu0 0.0
        %294 = vmatpush.msra.mxu0 0.0
        %295 = vmatpush.msra.mxu0 0.0
        %296 = vmatpush.msra.mxu0 0.0
        %297 = vmatpush.msra.mxu0 %v189
        %298 = vmatpush.msra.mxu0 %v188
        %299 = vmatpush.msra.mxu0 %v187
        %300 = vmatpush.msra.mxu0 %v186
        %301 = vmatpush.msra.mxu0 %v185
        %302 = vmatpush.msra.mxu0 %v184
        %303 = vmatpush.msra.mxu0 %v183
        %304 = vmatpush.msra.mxu0 %v182
        %305 = vmatpush.msra.mxu0 %v181
        %306 = vmatpush.msra.mxu0 %v180
        %307 = vmatpush.msra.mxu0 %v179
        %308 = vmatpush.msra.mxu0 %v178
        %309 = vmatmul.f32.gmra.mxu0 %v288
        %v310 = vpop.f32.mrf.mxu0
        %v311 = vadd.f32 0.0, %v310
        %312 = vmatmul.f32.gmra.mxu0 %v291
        %v313 = vpop.f32.mrf.mxu0
        %v314 = vadd.f32 0.0, %v313
        %315 = vdwg.mxu0
        %v316 = vsel %vm249, %v311, -inf
        %v317 = vsel %vm251, %v314, -inf
        %v318 = vmax.f32 %v316, %v317
        %v319 = vrot.slane %v318, 4
        %v320 = vmax.f32 %v318, %v319
        %v321 = vrot.slane %v320, 2
        %v322 = vmax.f32 %v320, %v321
        %v323 = vrot.slane %v322, 1
        %v324 = vmax.f32 %v322, %v323
        %325 = vst.msk [vmem:[#allocation3 + $0x1] sm:$0x1] %vm260, %v324
        %s326 = scalar_lea.vmem %s172, 32
        %v327 = vld [vmem:[%s326] sm:$0xff]
        %v328 = vld [vmem:[%s326 + $0x8] sm:$0xf]
        %329 = vst.msk [vmem:[#allocation2 + $0x1] sm:$0xff] %vm192, %v327
        %330 = vst.msk [vmem:[#allocation2 + $0x9] sm:$0x7] %vm194, %v328
        %333 = vrot.lane.b32.xlu0 %v327, 32
        %v334 = vpop.permute.xlu0 %333
        %335 = vrot.lane.b32.xlu0 %v328, 32
        %v336 = vpop.permute.xlu0 %335
        %339 = vst.msk [vmem:[#allocation2] sm:$0xff] %vm204, %v334
        %340 = vst.msk [vmem:[#allocation2 + $0x8] sm:$0xf] %vm206, %v336
        %341 = vrot.lane.b32.xlu0 %v327, 64
        %v342 = vpop.permute.xlu0 %341
        %343 = vrot.lane.b32.xlu0 %v328, 64
        %v344 = vpop.permute.xlu0 %343
        %347 = vst.msk [vmem:[#allocation2 - $0x1] sm:$0xfe] %vm214, %v342
        %348 = vst.msk [vmem:[#allocation2 + $0x7] sm:$0xf] %vm216, %v344
        %v349 = vld [vmem:[#allocation2] sm:$0xff]
        %v350 = vld [vmem:[#allocation2 + $0x8] sm:$0xf]
        %v352 = vsel %vm174, %v349, 0
        %v355 = vsel %vm174, %v350, 0
        %357 = vmatpush.msra.mxu0 0.0
        %358 = vmatpush.msra.mxu0 0.0
        %359 = vmatpush.msra.mxu0 0.0
        %360 = vmatpush.msra.mxu0 0.0
        %361 = vmatpush.msra.mxu0 %v189
        %362 = vmatpush.msra.mxu0 %v188
        %363 = vmatpush.msra.mxu0 %v187
        %364 = vmatpush.msra.mxu0 %v186
        %365 = vmatpush.msra.mxu0 %v185
        %366 = vmatpush.msra.mxu0 %v184
        %367 = vmatpush.msra.mxu0 %v183
        %368 = vmatpush.msra.mxu0 %v182
        %369 = vmatpush.msra.mxu0 %v181
        %370 = vmatpush.msra.mxu0 %v180
        %371 = vmatpush.msra.mxu0 %v179
        %372 = vmatpush.msra.mxu0 %v178
        %373 = vmatmul.f32.gmra.mxu0 %v352
        %v374 = vpop.f32.mrf.mxu0
        %v375 = vadd.f32 0.0, %v374
        %376 = vmatmul.f32.gmra.mxu0 %v355
        %v377 = vpop.f32.mrf.mxu0
        %v378 = vadd.f32 0.0, %v377
        %379 = vdwg.mxu0
        %v380 = vsel %vm249, %v375, -inf
        %v381 = vsel %vm251, %v378, -inf
        %v382 = vmax.f32 %v380, %v381
        %v383 = vrot.slane %v382, 4
        %v384 = vmax.f32 %v382, %v383
        %v385 = vrot.slane %v384, 2
        %v386 = vmax.f32 %v384, %v385
        %v387 = vrot.slane %v386, 1
        %v388 = vmax.f32 %v386, %v387
        %389 = vst.msk [vmem:[#allocation3 + $0x2] sm:$0x1] %vm260, %v388
        %s390 = scalar_lea.vmem %s172, 48
        %v391 = vld [vmem:[%s390] sm:$0xff]
        %v392 = vld [vmem:[%s390 + $0x8] sm:$0xf]
        %393 = vst.msk [vmem:[#allocation2 + $0x1] sm:$0xff] %vm192, %v391
        %394 = vst.msk [vmem:[#allocation2 + $0x9] sm:$0x7] %vm194, %v392
        %397 = vrot.lane.b32.xlu0 %v391, 32
        %v398 = vpop.permute.xlu0 %397
        %399 = vrot.lane.b32.xlu0 %v392, 32
        %v400 = vpop.permute.xlu0 %399
        %403 = vst.msk [vmem:[#allocation2] sm:$0xff] %vm204, %v398
        %404 = vst.msk [vmem:[#allocation2 + $0x8] sm:$0xf] %vm206, %v400
        %405 = vrot.lane.b32.xlu0 %v391, 64
        %v406 = vpop.permute.xlu0 %405
        %407 = vrot.lane.b32.xlu0 %v392, 64
        %v408 = vpop.permute.xlu0 %407
        %411 = vst.msk [vmem:[#allocation2 - $0x1] sm:$0xfe] %vm214, %v406
        %412 = vst.msk [vmem:[#allocation2 + $0x7] sm:$0xf] %vm216, %v408
        %v413 = vld [vmem:[#allocation2] sm:$0xff]
        %v414 = vld [vmem:[#allocation2 + $0x8] sm:$0xf]
        %v416 = vsel %vm174, %v413, 0
        %v419 = vsel %vm174, %v414, 0
        %421 = vmatpush.msra.mxu0 0.0
        %422 = vmatpush.msra.mxu0 0.0
        %423 = vmatpush.msra.mxu0 0.0
        %424 = vmatpush.msra.mxu0 0.0
        %425 = vmatpush.msra.mxu0 %v189
        %426 = vmatpush.msra.mxu0 %v188
        %427 = vmatpush.msra.mxu0 %v187
        %428 = vmatpush.msra.mxu0 %v186
        %429 = vmatpush.msra.mxu0 %v185
        %430 = vmatpush.msra.mxu0 %v184
        %431 = vmatpush.msra.mxu0 %v183
        %432 = vmatpush.msra.mxu0 %v182
        %433 = vmatpush.msra.mxu0 %v181
        %434 = vmatpush.msra.mxu0 %v180
        %435 = vmatpush.msra.mxu0 %v179
        %436 = vmatpush.msra.mxu0 %v178
        %437 = vmatmul.f32.gmra.mxu0 %v416
        %v438 = vpop.f32.mrf.mxu0
        %v439 = vadd.f32 0.0, %v438
        %440 = vmatmul.f32.gmra.mxu0 %v419
        %v441 = vpop.f32.mrf.mxu0
        %v442 = vadd.f32 0.0, %v441
        %443 = vdwg.mxu0
        %v444 = vsel %vm249, %v439, -inf
        %v445 = vsel %vm251, %v442, -inf
        %v446 = vmax.f32 %v444, %v445
        %v447 = vrot.slane %v446, 4
        %v448 = vmax.f32 %v446, %v447
        %v449 = vrot.slane %v448, 2
        %v450 = vmax.f32 %v448, %v449
        %v451 = vrot.slane %v450, 1
        %v452 = vmax.f32 %v450, %v451
        %453 = vst.msk [vmem:[#allocation3 + $0x3] sm:$0x1] %vm260, %v452
        %s454 = scalar_lea.vmem %s172, 64
        %v455 = vld [vmem:[%s454] sm:$0xff]
        %v456 = vld [vmem:[%s454 + $0x8] sm:$0xf]
        %457 = vst.msk [vmem:[#allocation2 + $0x1] sm:$0xff] %vm192, %v455
        %458 = vst.msk [vmem:[#allocation2 + $0x9] sm:$0x7] %vm194, %v456
        %461 = vrot.lane.b32.xlu0 %v455, 32
        %v462 = vpop.permute.xlu0 %461
        %463 = vrot.lane.b32.xlu0 %v456, 32
        %v464 = vpop.permute.xlu0 %463
        %467 = vst.msk [vmem:[#allocation2] sm:$0xff] %vm204, %v462
        %468 = vst.msk [vmem:[#allocation2 + $0x8] sm:$0xf] %vm206, %v464
        %469 = vrot.lane.b32.xlu0 %v455, 64
        %v470 = vpop.permute.xlu0 %469
        %471 = vrot.lane.b32.xlu0 %v456, 64
        %v472 = vpop.permute.xlu0 %471
        %475 = vst.msk [vmem:[#allocation2 - $0x1] sm:$0xfe] %vm214, %v470
        %476 = vst.msk [vmem:[#allocation2 + $0x7] sm:$0xf] %vm216, %v472
        %v477 = vld [vmem:[#allocation2] sm:$0xff]
        %v478 = vld [vmem:[#allocation2 + $0x8] sm:$0xf]
        %v480 = vsel %vm174, %v477, 0
        %v483 = vsel %vm174, %v478, 0
        %485 = vmatpush.msra.mxu0 0.0
        %486 = vmatpush.msra.mxu0 0.0
        %487 = vmatpush.msra.mxu0 0.0
        %488 = vmatpush.msra.mxu0 0.0
        %489 = vmatpush.msra.mxu0 %v189
        %490 = vmatpush.msra.mxu0 %v188
        %491 = vmatpush.msra.mxu0 %v187
        %492 = vmatpush.msra.mxu0 %v186
        %493 = vmatpush.msra.mxu0 %v185
        %494 = vmatpush.msra.mxu0 %v184
        %495 = vmatpush.msra.mxu0 %v183
        %496 = vmatpush.msra.mxu0 %v182
        %497 = vmatpush.msra.mxu0 %v181
        %498 = vmatpush.msra.mxu0 %v180
        %499 = vmatpush.msra.mxu0 %v179
        %500 = vmatpush.msra.mxu0 %v178
        %501 = vmatmul.f32.gmra.mxu0 %v480
        %v502 = vpop.f32.mrf.mxu0
        %v503 = vadd.f32 0.0, %v502
        %504 = vmatmul.f32.gmra.mxu0 %v483
        %v505 = vpop.f32.mrf.mxu0
        %v506 = vadd.f32 0.0, %v505
        %507 = vdwg.mxu0
        %v508 = vsel %vm249, %v503, -inf
        %v509 = vsel %vm251, %v506, -inf
        %v510 = vmax.f32 %v508, %v509
        %v511 = vrot.slane %v510, 4
        %v512 = vmax.f32 %v510, %v511
        %v513 = vrot.slane %v512, 2
        %v514 = vmax.f32 %v512, %v513
        %v515 = vrot.slane %v514, 1
        %v516 = vmax.f32 %v514, %v515
        %517 = vst.msk [vmem:[#allocation3 + $0x4] sm:$0x1] %vm260, %v516
        %s518 = scalar_lea.vmem %s172, 80
        %v519 = vld [vmem:[%s518] sm:$0xff]
        %v520 = vld [vmem:[%s518 + $0x8] sm:$0xf]
        %521 = vst.msk [vmem:[#allocation2 + $0x1] sm:$0xff] %vm192, %v519
        %522 = vst.msk [vmem:[#allocation2 + $0x9] sm:$0x7] %vm194, %v520
        %525 = vrot.lane.b32.xlu0 %v519, 32
        %v526 = vpop.permute.xlu0 %525
        %527 = vrot.lane.b32.xlu0 %v520, 32
        %v528 = vpop.permute.xlu0 %527
        %531 = vst.msk [vmem:[#allocation2] sm:$0xff] %vm204, %v526
        %532 = vst.msk [vmem:[#allocation2 + $0x8] sm:$0xf] %vm206, %v528
        %533 = vrot.lane.b32.xlu0 %v519, 64
        %v534 = vpop.permute.xlu0 %533
        %535 = vrot.lane.b32.xlu0 %v520, 64
        %v536 = vpop.permute.xlu0 %535
        %539 = vst.msk [vmem:[#allocation2 - $0x1] sm:$0xfe] %vm214, %v534
        %540 = vst.msk [vmem:[#allocation2 + $0x7] sm:$0xf] %vm216, %v536
        %v541 = vld [vmem:[#allocation2] sm:$0xff]
        %v542 = vld [vmem:[#allocation2 + $0x8] sm:$0xf]
        %v544 = vsel %vm174, %v541, 0
        %v547 = vsel %vm174, %v542, 0
        %549 = vmatpush.msra.mxu0 0.0
        %550 = vmatpush.msra.mxu0 0.0
        %551 = vmatpush.msra.mxu0 0.0
        %552 = vmatpush.msra.mxu0 0.0
        %553 = vmatpush.msra.mxu0 %v189
        %554 = vmatpush.msra.mxu0 %v188
        %555 = vmatpush.msra.mxu0 %v187
        %556 = vmatpush.msra.mxu0 %v186
        %557 = vmatpush.msra.mxu0 %v185
        %558 = vmatpush.msra.mxu0 %v184
        %559 = vmatpush.msra.mxu0 %v183
        %560 = vmatpush.msra.mxu0 %v182
        %561 = vmatpush.msra.mxu0 %v181
        %562 = vmatpush.msra.mxu0 %v180
        %563 = vmatpush.msra.mxu0 %v179
        %564 = vmatpush.msra.mxu0 %v178
        %565 = vmatmul.f32.gmra.mxu0 %v544
        %v566 = vpop.f32.mrf.mxu0
        %v567 = vadd.f32 0.0, %v566
        %568 = vmatmul.f32.gmra.mxu0 %v547
        %v569 = vpop.f32.mrf.mxu0
        %v570 = vadd.f32 0.0, %v569
        %571 = vdwg.mxu0
        %v572 = vsel %vm249, %v567, -inf
        %v573 = vsel %vm251, %v570, -inf
        %v574 = vmax.f32 %v572, %v573
        %v575 = vrot.slane %v574, 4
        %v576 = vmax.f32 %v574, %v575
        %v577 = vrot.slane %v576, 2
        %v578 = vmax.f32 %v576, %v577
        %v579 = vrot.slane %v578, 1
        %v580 = vmax.f32 %v578, %v579
        %581 = vst.msk [vmem:[#allocation3 + $0x5] sm:$0x1] %vm260, %v580
        %s582 = scalar_lea.vmem %s172, 96
        %v583 = vld [vmem:[%s582] sm:$0xff]
        %v584 = vld [vmem:[%s582 + $0x8] sm:$0xf]
        %585 = vst.msk [vmem:[#allocation2 + $0x1] sm:$0xff] %vm192, %v583
        %586 = vst.msk [vmem:[#allocation2 + $0x9] sm:$0x7] %vm194, %v584
        %589 = vrot.lane.b32.xlu0 %v583, 32
        %v590 = vpop.permute.xlu0 %589
        %591 = vrot.lane.b32.xlu0 %v584, 32
        %v592 = vpop.permute.xlu0 %591
        %595 = vst.msk [vmem:[#allocation2] sm:$0xff] %vm204, %v590
        %596 = vst.msk [vmem:[#allocation2 + $0x8] sm:$0xf] %vm206, %v592
        %597 = vrot.lane.b32.xlu0 %v583, 64
        %v598 = vpop.permute.xlu0 %597
        %599 = vrot.lane.b32.xlu0 %v584, 64
        %v600 = vpop.permute.xlu0 %599
        %603 = vst.msk [vmem:[#allocation2 - $0x1] sm:$0xfe] %vm214, %v598
        %604 = vst.msk [vmem:[#allocation2 + $0x7] sm:$0xf] %vm216, %v600
        %v605 = vld [vmem:[#allocation2] sm:$0xff]
        %v606 = vld [vmem:[#allocation2 + $0x8] sm:$0xf]
        %v608 = vsel %vm174, %v605, 0
        %v611 = vsel %vm174, %v606, 0
        %613 = vmatpush.msra.mxu0 0.0
        %614 = vmatpush.msra.mxu0 0.0
        %615 = vmatpush.msra.mxu0 0.0
        %616 = vmatpush.msra.mxu0 0.0
        %617 = vmatpush.msra.mxu0 %v189
        %618 = vmatpush.msra.mxu0 %v188
        %619 = vmatpush.msra.mxu0 %v187
        %620 = vmatpush.msra.mxu0 %v186
        %621 = vmatpush.msra.mxu0 %v185
        %622 = vmatpush.msra.mxu0 %v184
        %623 = vmatpush.msra.mxu0 %v183
        %624 = vmatpush.msra.mxu0 %v182
        %625 = vmatpush.msra.mxu0 %v181
        %626 = vmatpush.msra.mxu0 %v180
        %627 = vmatpush.msra.mxu0 %v179
        %628 = vmatpush.msra.mxu0 %v178
        %629 = vmatmul.f32.gmra.mxu0 %v608
        %v630 = vpop.f32.mrf.mxu0
        %v631 = vadd.f32 0.0, %v630
        %632 = vmatmul.f32.gmra.mxu0 %v611
        %v633 = vpop.f32.mrf.mxu0
        %v634 = vadd.f32 0.0, %v633
        %635 = vdwg.mxu0
        %v636 = vsel %vm249, %v631, -inf
        %v637 = vsel %vm251, %v634, -inf
        %v638 = vmax.f32 %v636, %v637
        %v639 = vrot.slane %v638, 4
        %v640 = vmax.f32 %v638, %v639
        %v641 = vrot.slane %v640, 2
        %v642 = vmax.f32 %v640, %v641
        %v643 = vrot.slane %v642, 1
        %v644 = vmax.f32 %v642, %v643
        %645 = vst.msk [vmem:[#allocation3 + $0x6] sm:$0x1] %vm260, %v644
        %s646 = scalar_lea.vmem %s172, 112
        %v647 = vld [vmem:[%s646] sm:$0xff]
        %v648 = vld [vmem:[%s646 + $0x8] sm:$0xf]
        %649 = vst.msk [vmem:[#allocation2 + $0x1] sm:$0xff] %vm192, %v647
        %650 = vst.msk [vmem:[#allocation2 + $0x9] sm:$0x7] %vm194, %v648
        %653 = vrot.lane.b32.xlu0 %v647, 32
        %v654 = vpop.permute.xlu0 %653
        %655 = vrot.lane.b32.xlu0 %v648, 32
        %v656 = vpop.permute.xlu0 %655
        %659 = vst.msk [vmem:[#allocation2] sm:$0xff] %vm204, %v654
        %660 = vst.msk [vmem:[#allocation2 + $0x8] sm:$0xf] %vm206, %v656
        %661 = vrot.lane.b32.xlu0 %v647, 64
        %v662 = vpop.permute.xlu0 %661
        %663 = vrot.lane.b32.xlu0 %v648, 64
        %v664 = vpop.permute.xlu0 %663
        %667 = vst.msk [vmem:[#allocation2 - $0x1] sm:$0xfe] %vm214, %v662
        %668 = vst.msk [vmem:[#allocation2 + $0x7] sm:$0xf] %vm216, %v664
        %v669 = vld [vmem:[#allocation2] sm:$0xff]
        %v670 = vld [vmem:[#allocation2 + $0x8] sm:$0xf]
        %v672 = vsel %vm174, %v669, 0
        %v675 = vsel %vm174, %v670, 0
        %677 = vmatpush.msra.mxu0 0.0
        %678 = vmatpush.msra.mxu0 0.0
        %679 = vmatpush.msra.mxu0 0.0
        %680 = vmatpush.msra.mxu0 0.0
        %681 = vmatpush.msra.mxu0 %v189
        %682 = vmatpush.msra.mxu0 %v188
        %683 = vmatpush.msra.mxu0 %v187
        %684 = vmatpush.msra.mxu0 %v186
        %685 = vmatpush.msra.mxu0 %v185
        %686 = vmatpush.msra.mxu0 %v184
        %687 = vmatpush.msra.mxu0 %v183
        %688 = vmatpush.msra.mxu0 %v182
        %689 = vmatpush.msra.mxu0 %v181
        %690 = vmatpush.msra.mxu0 %v180
        %691 = vmatpush.msra.mxu0 %v179
        %692 = vmatpush.msra.mxu0 %v178
        %693 = vmatmul.f32.gmra.mxu0 %v672
        %v694 = vpop.f32.mrf.mxu0
        %v695 = vadd.f32 0.0, %v694
        %696 = vmatmul.f32.gmra.mxu0 %v675
        %v697 = vpop.f32.mrf.mxu0
        %v698 = vadd.f32 0.0, %v697
        %699 = vdwg.mxu0
        %v700 = vsel %vm249, %v695, -inf
        %v701 = vsel %vm251, %v698, -inf
        %v702 = vmax.f32 %v700, %v701
        %v703 = vrot.slane %v702, 4
        %v704 = vmax.f32 %v702, %v703
        %v705 = vrot.slane %v704, 2
        %v706 = vmax.f32 %v704, %v705
        %v707 = vrot.slane %v706, 1
        %v708 = vmax.f32 %v706, %v707
        %709 = vst.msk [vmem:[#allocation3 + $0x7] sm:$0x1] %vm260, %v708
        %v710 = vld [vmem:[#allocation3] sm:$0xff]
        %v711 = vld [vmem:[%s2] sm:$0x1]
        %v713 = vperm.slane %v711, 0
        %v715 = vadd.f32 %v710, %v713
        %v716 = vmax.f32 %v715, 0.0
        %717 = vst.msk [vmem:[%s166] sm:$0xff] %vm249, %v716
        %s718 = sand.u32 %s93, 1
        %s719 = scalar_lea.sflag [#allocation5], %s718
        %s720 = sand.u32 %s93, 1
        %s721 = smul.addr %s720, 8
        %s722 = scalar_lea.vmem [#allocation4], %s721
        // Predicated region
        $region33: #{tpu_custom_call.1} parent=31 // pred_check
          %p723 = pneg %p103
        $region34: #{tpu_custom_call.1} parent=31 // pred_check_branch
          %725 = sbr.rel (%p723) target = $region36
        $region35: #{tpu_custom_call.1} parent=31 // pred_region
          %727 = vsyncadd %s719, 0
          %s728 = smul.addr %s17, 8
          %s729 = scalar_lea.hbm %s3, %s728
          %s731 = sshll.u32 %s722, 4
          %s732 = int_to_ptr.vmem [resolvable:$true] %s731
          %s733 = sshll.u32 %s729, 4
          %s734 = int_to_ptr.hbm [resolvable:$true] %s733
          %736 = dma.vmem_to_hbm [thread:$0]  %s732, 128, %s734, %s719
        $region36: #{tpu_custom_call.1} parent=31 // pred_fallthru
          _
      $region32: #{tpu_custom_call.1} parent=5 // pred_fallthru
        _
      %p737 = scmp.le.s32.totalorder 2, %s12
      // Predicated region
      $region37: #{tpu_custom_call.1} parent=5 // pred_check
        %p738 = pneg %p737
      $region38: #{tpu_custom_call.1} parent=5 // pred_check_branch
        %740 = sbr.rel (%p738) target = $region40
      $region39: #{tpu_custom_call.1} parent=5 // pred_region
        %s741 = ssub.s32 %s12, 2
        // Predicated region
        $region41: #{tpu_custom_call.1} parent=39 // pred_check
          %p742 = pneg %p109
        $region42: #{tpu_custom_call.1} parent=39 // pred_check_branch
          %744 = sbr.rel (%p742) target = $region44
        $region43: #{tpu_custom_call.1} parent=39 // pred_region
          %s745 = sand.u32 %s94, 1
          %s746 = scalar_lea.sflag [#allocation5], %s745
          %s747 = sand.u32 %s94, 1
          %s748 = smul.addr %s747, 8
          %s749 = scalar_lea.vmem [#allocation4], %s748
          %751 = dma.done %s746, 128
        $region44: #{tpu_custom_call.1} parent=39 // pred_fallthru
          _
      $region40: #{tpu_custom_call.1} parent=5 // pred_fallthru
        _
    $region6: #{tpu_custom_call.1} parent=1 // loop_footer
      %s16 = sadd.s32 1, %s12
    $region7: #{tpu_custom_call.1} parent=1 // loop_footer_branch
      %11 = sbr.rel target = $region3
    $region8: #{tpu_custom_call.1} parent=1 // loop_exit
      _
    %752 = vsyncpa [#allocation5], 1
    %s753 = scalar_lea.sflag [#allocation5], 1
    %754 = vsyncpa %s753, 1

</llo_original>
